<compile_context>
chip_gen: v7x
topology: tpu7x:2x2x1
jax: 0.10.0
libtpu: 0.0.40
codegen_flags: <defaults>
</compile_context>

<pallas_src>
import functools

import jax
import jax.numpy as jnp
from jax.experimental import pallas as pl
from jax.experimental.pallas import tpu as pltpu

# Deterministic mixin parameters (StableLossMixin.eps, ScaledLossMixin.scale).
EPS = 1e-8
SCALE = 1.0

_MIB = 1024 * 1024
_VMEM_RESERVE = 6 * _MIB        # headroom for scratch / output / compiler use


def _vmem_budget_bytes():
    """Generation-aware VMEM budget: ~half of physical VMEM, capped at 64 MiB
    (v5e/v6e: 64 of 128 MiB; v7x: 32 of 64 MiB)."""
    phys = 128 * _MIB
    try:
        phys = int(getattr(pltpu.get_tpu_info(), "vmem_capacity_bytes", phys))
    except Exception:
        pass
    return min(phys // 2, 64 * _MIB)


def _pick_lane_layout(hw, max_lanes=1024):
    """Pick a lane width L (multiple of 128, <= max_lanes) and the padded
    spatial length (multiple of L).  No padding when H*W is already a
    multiple of 128 (the common case for real image sizes)."""
    padded = ((hw + 127) // 128) * 128
    lanes = 128
    for cand in range(256, min(padded, max_lanes) + 1, 128):
        if padded % cand == 0:
            lanes = cand
    return lanes, padded


def _pick_tile_rows(rows, lanes, itemsizes, sublane_mult, input_budget_bytes):
    """Largest legal sublane tile (divides `rows`; multiple of 8 or == rows)
    whose double-buffered input streams fit the VMEM budget, preferring
    multiples of `sublane_mult` (16 for bf16 / 32 for int8 packing)."""
    if rows < 8 or rows % 8 != 0:
        return rows                                   # full-extent block
    per_row = 2 * lanes * sum(itemsizes)               # all streams, 2 buffers
    max_rows = max(int(input_budget_bytes // per_row), 1)
    if rows <= max_rows:
        return rows                                    # whole row in one tile
    divisors = [t for t in range(8, rows, 8) if rows % t == 0]
    fitting = [t for t in divisors if t <= max_rows]
    if not fitting:
        return divisors[0] if divisors else rows
    aligned = [t for t in fitting if t % sublane_mult == 0]
    return max(aligned) if aligned else max(fitting)


def _dice_kernel(idx_ref, *refs, eps, scale, use_mask, groups, sub):
    # idx_ref: SMEM scalar-prefetch row indices (drives the index_maps).
    # refs (use_mask=True):  x_ref, y_ref, m_ref, o_ref, acc_ref
    # refs (use_mask=False): x_ref, y_ref,        o_ref, acc_ref
    if use_mask:
        x_ref, y_ref, m_ref, o_ref, acc_ref = refs
    else:
        x_ref, y_ref, o_ref, acc_ref = refs
        m_ref = None

    k = pl.program_id(1)                 # spatial-reduction step (innermost)

    # Zero the per-row partial accumulators at the start of each row.
    @pl.when(k == 0)
    def _():
        acc_ref[...] = jnp.zeros_like(acc_ref)

    # (T, L) lane-dense tile of the current selected row; cast after the DMA.
    x = jax.nn.sigmoid(x_ref[0].astype(jnp.float32))
    y = y_ref[0].astype(jnp.float32)
    if use_mask:
        m = m_ref[0].astype(jnp.float32)   # int8 {0,1} -> plain multiply
        x = x * m
        y = y * m

    def fold(p):
        # (groups*sub, L) -> (sub, L) with whole-vreg VALU adds only; the
        # cross-sublane / cross-lane reduction is deferred to the last step.
        acc = p[0:sub, :]
        for g in range(1, groups):
            acc = acc + p[g * sub:(g + 1) * sub, :]
        return acc

    acc_ref[0] += fold(x * y)
    acc_ref[1] += fold(x * x)
    acc_ref[2] += fold(y * y)

    # Finalize this row: fold lanes + sublanes once, write the per-row loss.
    @pl.when(k == pl.num_programs(1) - 1)
    def _():
        s = jnp.sum(acc_ref[...], axis=-1, keepdims=True)     # (3, sub, 1)
        s = jnp.sum(s, axis=1, keepdims=True)                 # (3, 1, 1)
        inter, xx, yy = s[0], s[1], s[2]                      # each (1, 1)
        loss = 1.0 - 2.0 * inter / jnp.maximum(xx + yy, eps)  # clamp(min=eps)
        o_ref[0] = jnp.broadcast_to(loss * scale,
                                    o_ref.shape[1:]).astype(o_ref.dtype)


def _dice_pallas(idx, x3, y3, m3, *, eps, scale, tile_rows, vmem_limit):
    n = int(idx.shape[0])
    _, rows, lanes = x3.shape
    use_mask = m3 is not None

    t = int(tile_rows)
    assert rows % t == 0 and (t % 8 == 0 or t == rows), (rows, t)
    k_steps = rows // t
    sub = 8 if t % 8 == 0 else t
    groups = t // sub

    def row_map(i, k, idx_ref):
        # Data-dependent row selection via scalar prefetch (fused gather).
        return (idx_ref[i], k, 0)

    in_specs = [pl.BlockSpec((1, t, lanes), row_map),
                pl.BlockSpec((1, t, lanes), row_map)]
    operands = [x3, y3]
    if use_mask:
        in_specs.append(pl.BlockSpec((1, t, lanes), row_map))
        operands.append(m3)
    # TODO(synk): consider pipeline_mode=pl.Buffered(3) on v5e if profiles show
    # exposed DMA latency at the gathered-row boundaries.

    kernel = functools.partial(_dice_kernel, eps=eps, scale=scale,
                               use_mask=use_mask, groups=groups, sub=sub)

    out = pl.pallas_call(
        kernel,
        # Per-row, lane-dense (1, 1, 128) output blocks: no shared-scalar
        # write race, so the row axis can be split across v7x's TensorCores.
        out_shape=jax.ShapeDtypeStruct((n, 1, 128), jnp.float32),
        grid_spec=pltpu.PrefetchScalarGridSpec(
            num_scalar_prefetch=1,
            grid=(n, k_steps),
            in_specs=in_specs,
            out_specs=pl.BlockSpec((1, 1, 128), lambda i, k, idx_ref: (i, 0, 0)),
            scratch_shapes=[pltpu.VMEM((3, sub, lanes), jnp.float32)],
        ),
        compiler_params=pltpu.CompilerParams(
            dimension_semantics=("parallel", "arbitrary"),
            vmem_limit_bytes=int(vmem_limit),
        ),
    )(idx, *operands)
    return out[:, 0, 0]


def weighted_stuff_dice_loss(x, y, y_num, y_mask, index_mask,
                             *, eps=EPS, scale=SCALE,
                             lane_width=None, tile_rows=None):
    """JAX equivalent of WeightedStuffDiceLoss.forward.

    x:          logits, reshapeable to (-1, H, W), any float dtype
    y:          targets with y.shape[-2:] == (H, W), any float dtype
    y_num:      static python int; MUST equal index_mask.sum() (PyTorch
                contract) — fewer true entries would silently double-count
                row 0 via the size-padded nonzero below.
    y_mask:     optional validity mask, reshapeable to (-1, H, W)
    index_mask: boolean over the flattened leading axis
    lane_width: optional lane-width override (multiple of 128)
    tile_rows:  optional sublane-tile override (divides rows; mult of 8 or
                equal to rows)
    """
    if y_num == 0:
        return jnp.mean(x) * 0.0

    h, w = y.shape[-2], y.shape[-1]
    hw = h * w

    if lane_width is None:
        lanes, padded = _pick_lane_layout(hw)
    else:
        lanes = int(lane_width)
        assert lanes % 128 == 0, lanes
        padded = ((hw + lanes - 1) // lanes) * lanes
    pad = padded - hw
    rows = padded // lanes

    x2 = x.reshape(-1, hw)
    y2 = y.reshape(-1, hw)
    if y_mask is not None:
        # int8 {0,1}: half the HBM bytes of bf16, expanded to f32 on the VPU.
        m2 = (y_mask.reshape(-1, hw) != 0).astype(jnp.int8)
    else:
        m2 = None           # no dummy ones-slab is built or streamed

    if pad:
        # Pad logits with a huge negative value (sigmoid -> exactly 0) and
        # targets/masks with 0 so padded lanes contribute nothing.  One-off
        # HBM copy; H*W already a multiple of 128 pays nothing (no pad).
        neg = float(jnp.finfo(x2.dtype).min)
        x2 = jnp.pad(x2, ((0, 0), (0, pad)), constant_values=neg)
        y2 = jnp.pad(y2, ((0, 0), (0, pad)), constant_values=0)
        if m2 is not None:
            m2 = jnp.pad(m2, ((0, 0), (0, pad)), constant_values=0)

    x3 = x2.reshape(-1, rows, lanes)
    y3 = y2.reshape(-1, rows, lanes)
    m3 = m2.reshape(-1, rows, lanes) if m2 is not None else None

    # Row indices of the y_num selected masks (consumed by scalar prefetch).
    idx = jnp.nonzero(index_mask.reshape(-1), size=int(y_num))[0]
    idx = idx.astype(jnp.int32)

    streams = [x3, y3] + ([m3] if m3 is not None else [])
    itemsizes = [s.dtype.itemsize for s in streams]
    sublane_mult = max(max(32 // s.dtype.itemsize for s in streams), 8)

    budget = _vmem_budget_bytes()
    if tile_rows is None:
        tile_rows = _pick_tile_rows(rows, lanes, itemsizes, sublane_mult,
                                    budget - _VMEM_RESERVE)

    per_row = _dice_pallas(idx, x3, y3, m3, eps=eps, scale=scale,
                           tile_rows=tile_rows, vmem_limit=budget)
    return per_row.sum()


def _reference(x, y, y_num, y_mask, index_mask, *, eps=EPS, scale=SCALE):
    # Pure-JAX reference mirroring the PyTorch code (f32 math).
    if y_num == 0:
        return jnp.mean(x) * 0.0
    h, w = y.shape[-2], y.shape[-1]
    idx = jnp.nonzero(index_mask.reshape(-1), size=int(y_num))[0]
    xs = x.reshape(-1, h, w)[idx].reshape(int(y_num), h * w).astype(jnp.float32)
    xs = jax.nn.sigmoid(xs)
    ys = y.reshape(-1, h, w)[idx].reshape(int(y_num), h * w).astype(jnp.float32)
    if y_mask is not None:
        ms = y_mask.reshape(-1, h, w)[idx].reshape(int(y_num), h * w)
        xs = jnp.where(ms, xs, 0.0)
        ys = jnp.where(ms, ys, 0.0)
    part = (xs ** 2).sum(-1) + (ys ** 2).sum(-1)
    loss = 1.0 - 2.0 * (ys * xs).sum(-1) / jnp.maximum(part, eps)
    return loss.sum() * scale


if __name__ == "__main__":
    key = jax.random.PRNGKey(0)
    k1, k2, k3, k4 = jax.random.split(key, 4)

    B, C, H, W = 2, 4, 16, 16     # PyTorch-style NCHW inputs
    Y_NUM = 5                     # number of selected stuff masks

    x = jax.random.normal(k1, (B, C, H, W), dtype=jnp.float32)
    y = (jax.random.uniform(k2, (B, C, H, W)) > 0.5).astype(jnp.bfloat16)
    y_mask = jax.random.uniform(k3, (B, C, H, W)) > 0.2   # bool validity mask

    # index_mask: exactly Y_NUM rows selected out of B*C, deterministic.
    perm = jax.random.permutation(k4, B * C)
    index_mask = jnp.zeros((B * C,), dtype=bool).at[perm[:Y_NUM]].set(True)

    # 1) Masked path (f32 logits + bf16 targets + int8 mask stream).
    out_m = jax.block_until_ready(
        weighted_stuff_dice_loss(x, y, Y_NUM, y_mask, index_mask))
    ref_m = jax.block_until_ready(_reference(x, y, Y_NUM, y_mask, index_mask))
    assert jnp.allclose(out_m, ref_m, rtol=1e-4, atol=1e-5), (out_m, ref_m)

    # 2) Unmasked path (2-input kernel variant, no mask stream at all).
    out_u = jax.block_until_ready(
        weighted_stuff_dice_loss(x, y, Y_NUM, None, index_mask))
    ref_u = jax.block_until_ready(_reference(x, y, Y_NUM, None, index_mask))
    assert jnp.allclose(out_u, ref_u, rtol=1e-4, atol=1e-5), (out_u, ref_u)

    # 3) Tiled-reduction path: forced narrow lane width / sublane tile so the
    #    grid has multiple reduction steps and groups > 1 per step.
    H2 = W2 = 64
    x2i = jax.random.normal(k1, (B, C, H2, W2), dtype=jnp.float32)
    y2i = (jax.random.uniform(k2, (B, C, H2, W2)) > 0.5).astype(jnp.bfloat16)
    m2i = jax.random.uniform(k3, (B, C, H2, W2)) > 0.2
    out_t = jax.block_until_ready(
        weighted_stuff_dice_loss(x2i, y2i, Y_NUM, m2i, index_mask,
                                 lane_width=128, tile_rows=16))
    ref_t = jax.block_until_ready(_reference(x2i, y2i, Y_NUM, m2i, index_mask))
    assert jnp.allclose(out_t, ref_t, rtol=1e-4, atol=1e-5), (out_t, ref_t)

    # 4) Padding path: H*W not a multiple of 128 (144 -> padded to 256 lanes).
    H3 = W3 = 12
    x3i = jax.random.normal(k1, (B, C, H3, W3), dtype=jnp.float32)
    y3i = (jax.random.uniform(k2, (B, C, H3, W3)) > 0.5).astype(jnp.bfloat16)
    m3i = jax.random.uniform(k3, (B, C, H3, W3)) > 0.2
    out_p = jax.block_until_ready(
        weighted_stuff_dice_loss(x3i, y3i, Y_NUM, m3i, index_mask))
    ref_p = jax.block_until_ready(_reference(x3i, y3i, Y_NUM, m3i, index_mask))
    assert jnp.allclose(out_p, ref_p, rtol=1e-4, atol=1e-5), (out_p, ref_p)

    print("KERNEL_OK")
</pallas_src>

<mosaic_0001>
module attributes {stable_mosaic.version = 11 : i64} {
  func.func @_dice_kernel(%arg0: i32, %arg1: i32, %arg2: memref<5xi32, #tpu.memory_space<smem>>, %arg3: memref<1x1x256xf32, #tpu.memory_space<vmem>>, %arg4: memref<1x1x256xbf16, #tpu.memory_space<vmem>>, %arg5: memref<1x1x256xi8, #tpu.memory_space<vmem>>, %arg6: memref<1x1x128xf32, #tpu.memory_space<vmem>>, %arg7: memref<3x1x256xf32, #tpu.memory_space<vmem>>) attributes {dimension_semantics = [#tpu.dimension_semantics<parallel>, #tpu.dimension_semantics<arbitrary>], iteration_bounds = array<i64: 5, 1>, scalar_prefetch = 1 : i64, scratch_operands = 1 : i64, tpu.core_type = #tpu.core_type<tc>, window_params = [{transform_indices = @transform_0, window_bounds = array<i64: 1, 1, 256>}, {transform_indices = @transform_1, window_bounds = array<i64: 1, 1, 256>}, {transform_indices = @transform_2, window_bounds = array<i64: 1, 1, 256>}, {transform_indices = @transform_3, window_bounds = array<i64: 1, 1, 128>}]} {
    %c0_i32 = arith.constant 0 : i32
    %0 = arith.cmpi eq, %arg1, %c0_i32 : i32
    %1 = arith.extui %0 : i1 to i32
    %c0_i32_0 = arith.constant 0 : i32
    %2 = arith.cmpi ne, %1, %c0_i32_0 : i32
    scf.if %2 {
      %cst_27 = arith.constant 0.000000e+00 : f32
      %42 = vector.broadcast %cst_27 : f32 to vector<3x1x256xf32>
      %c0_28 = arith.constant 0 : index
      %c0_29 = arith.constant 0 : index
      %c0_30 = arith.constant 0 : index
      %43 = vector.load %arg7[%c0_28, %c0_29, %c0_30] : memref<3x1x256xf32, #tpu.memory_space<vmem>>, vector<3x1x256xf32>
      tpu.vector_store %arg7[%c0_28, %c0_29, %c0_30], %42 {strides = array<i32>} : memref<3x1x256xf32, #tpu.memory_space<vmem>>, vector<3x1x256xf32>,
    } else {
    }
    %c0 = arith.constant 0 : index
    %c0_1 = arith.constant 0 : index
    %c0_2 = arith.constant 0 : index
    %3 = vector.load %arg3[%c0, %c0_1, %c0_2] : memref<1x1x256xf32, #tpu.memory_space<vmem>>, vector<1x1x256xf32>
    %4 = vector.shape_cast %3 : vector<1x1x256xf32> to vector<1x256xf32>
    %5 = arith.negf %4 : vector<1x256xf32>
    %6 = math.exp %5 : vector<1x256xf32>
    %cst = arith.constant 1.000000e+00 : f32
    %7 = vector.broadcast %cst : f32 to vector<1x256xf32>
    %8 = arith.addf %7, %6 : vector<1x256xf32>
    %9 = arith.divf %7, %8 : vector<1x256xf32>
    %c0_3 = arith.constant 0 : index
    %c0_4 = arith.constant 0 : index
    %c0_5 = arith.constant 0 : index
    %10 = vector.load %arg4[%c0_3, %c0_4, %c0_5] : memref<1x1x256xbf16, #tpu.memory_space<vmem>>, vector<1x1x256xbf16>
    %11 = vector.shape_cast %10 : vector<1x1x256xbf16> to vector<1x256xbf16>
    %12 = arith.extf %11 : vector<1x256xbf16> to vector<1x256xf32>
    %c0_6 = arith.constant 0 : index
    %c0_7 = arith.constant 0 : index
    %c0_8 = arith.constant 0 : index
    %13 = vector.load %arg5[%c0_6, %c0_7, %c0_8] : memref<1x1x256xi8, #tpu.memory_space<vmem>>, vector<1x1x256xi8>
    %14 = vector.shape_cast %13 : vector<1x1x256xi8> to vector<1x256xi8>
    %15 = arith.sitofp %14 : vector<1x256xi8> to vector<1x256xf32>
    %16 = arith.mulf %9, %15 : vector<1x256xf32>
    %17 = arith.mulf %12, %15 : vector<1x256xf32>
    %c0_9 = arith.constant 0 : index
    %c0_10 = arith.constant 0 : index
    %c0_11 = arith.constant 0 : index
    %18 = vector.load %arg7[%c0_9, %c0_10, %c0_11] : memref<3x1x256xf32, #tpu.memory_space<vmem>>, vector<1x1x256xf32>
    %19 = vector.shape_cast %18 : vector<1x1x256xf32> to vector<1x256xf32>
    %20 = arith.mulf %16, %17 : vector<1x256xf32>
    %21 = arith.addf %19, %20 : vector<1x256xf32>
    %c0_12 = arith.constant 0 : index
    %c0_13 = arith.constant 0 : index
    %c0_14 = arith.constant 0 : index
    %22 = vector.load %arg7[%c0_12, %c0_13, %c0_14] : memref<3x1x256xf32, #tpu.memory_space<vmem>>, vector<1x1x256xf32>
    %23 = vector.shape_cast %22 : vector<1x1x256xf32> to vector<1x256xf32>
    %24 = vector.shape_cast %21 : vector<1x256xf32> to vector<1x1x256xf32>
    tpu.vector_store %arg7[%c0_12, %c0_13, %c0_14], %24 {strides = array<i32>} : memref<3x1x256xf32, #tpu.memory_space<vmem>>, vector<1x1x256xf32>,
    %c1 = arith.constant 1 : index
    %c0_15 = arith.constant 0 : index
    %c0_16 = arith.constant 0 : index
    %25 = vector.load %arg7[%c1, %c0_15, %c0_16] : memref<3x1x256xf32, #tpu.memory_space<vmem>>, vector<1x1x256xf32>
    %26 = vector.shape_cast %25 : vector<1x1x256xf32> to vector<1x256xf32>
    %27 = arith.mulf %16, %16 : vector<1x256xf32>
    %28 = arith.addf %26, %27 : vector<1x256xf32>
    %c1_17 = arith.constant 1 : index
    %c0_18 = arith.constant 0 : index
    %c0_19 = arith.constant 0 : index
    %29 = vector.load %arg7[%c1_17, %c0_18, %c0_19] : memref<3x1x256xf32, #tpu.memory_space<vmem>>, vector<1x1x256xf32>
    %30 = vector.shape_cast %29 : vector<1x1x256xf32> to vector<1x256xf32>
    %31 = vector.shape_cast %28 : vector<1x256xf32> to vector<1x1x256xf32>
    tpu.vector_store %arg7[%c1_17, %c0_18, %c0_19], %31 {strides = array<i32>} : memref<3x1x256xf32, #tpu.memory_space<vmem>>, vector<1x1x256xf32>,
    %c2 = arith.constant 2 : index
    %c0_20 = arith.constant 0 : index
    %c0_21 = arith.constant 0 : index
    %32 = vector.load %arg7[%c2, %c0_20, %c0_21] : memref<3x1x256xf32, #tpu.memory_space<vmem>>, vector<1x1x256xf32>
    %33 = vector.shape_cast %32 : vector<1x1x256xf32> to vector<1x256xf32>
    %34 = arith.mulf %17, %17 : vector<1x256xf32>
    %35 = arith.addf %33, %34 : vector<1x256xf32>
    %c2_22 = arith.constant 2 : index
    %c0_23 = arith.constant 0 : index
    %c0_24 = arith.constant 0 : index
    %36 = vector.load %arg7[%c2_22, %c0_23, %c0_24] : memref<3x1x256xf32, #tpu.memory_space<vmem>>, vector<1x1x256xf32>
    %37 = vector.shape_cast %36 : vector<1x1x256xf32> to vector<1x256xf32>
    %38 = vector.shape_cast %35 : vector<1x256xf32> to vector<1x1x256xf32>
    tpu.vector_store %arg7[%c2_22, %c0_23, %c0_24], %38 {strides = array<i32>} : memref<3x1x256xf32, #tpu.memory_space<vmem>>, vector<1x1x256xf32>,
    %c0_i32_25 = arith.constant 0 : i32
    %39 = arith.cmpi eq, %arg1, %c0_i32_25 : i32
    %40 = arith.extui %39 : i1 to i32
    %c0_i32_26 = arith.constant 0 : i32
    %41 = arith.cmpi ne, %40, %c0_i32_26 : i32
    scf.if %41 {
      %c0_27 = arith.constant 0 : index
      %c0_28 = arith.constant 0 : index
      %c0_29 = arith.constant 0 : index
      %42 = vector.load %arg7[%c0_27, %c0_28, %c0_29] : memref<3x1x256xf32, #tpu.memory_space<vmem>>, vector<3x1x256xf32>
      %cst_30 = arith.constant dense<0.000000e+00> : vector<3x1xf32>
      %43 = vector.multi_reduction <add>, %42, %cst_30 [2] : vector<3x1x256xf32> to vector<3x1xf32>
      %44 = vector.shape_cast %43 : vector<3x1xf32> to vector<3x1x1xf32>
      %cst_31 = arith.constant dense<0.000000e+00> : vector<3x1xf32>
      %45 = vector.multi_reduction <add>, %44, %cst_31 [1] : vector<3x1x1xf32> to vector<3x1xf32>
      %46 = vector.shape_cast %45 : vector<3x1xf32> to vector<3x1x1xf32>
      %47 = vector.extract_strided_slice %46 {offsets = [0, 0, 0], sizes = [1, 1, 1], strides = [1, 1, 1]} : vector<3x1x1xf32> to vector<1x1x1xf32>
      %48 = vector.shape_cast %47 : vector<1x1x1xf32> to vector<1x1xf32>
      %49 = vector.extract_strided_slice %46 {offsets = [1, 0, 0], sizes = [1, 1, 1], strides = [1, 1, 1]} : vector<3x1x1xf32> to vector<1x1x1xf32>
      %50 = vector.shape_cast %49 : vector<1x1x1xf32> to vector<1x1xf32>
      %51 = vector.extract_strided_slice %46 {offsets = [2, 0, 0], sizes = [1, 1, 1], strides = [1, 1, 1]} : vector<3x1x1xf32> to vector<1x1x1xf32>
      %52 = vector.shape_cast %51 : vector<1x1x1xf32> to vector<1x1xf32>
      %cst_32 = arith.constant 2.000000e+00 : f32
      %53 = vector.broadcast %cst_32 : f32 to vector<1x1xf32>
      %54 = arith.mulf %53, %48 : vector<1x1xf32>
      %55 = arith.addf %50, %52 : vector<1x1xf32>
      %cst_33 = arith.constant 9.99999993E-9 : f32
      %56 = vector.broadcast %cst_33 : f32 to vector<1x1xf32>
      %57 = arith.maximumf %55, %56 : vector<1x1xf32>
      %58 = arith.divf %54, %57 : vector<1x1xf32>
      %cst_34 = arith.constant 1.000000e+00 : f32
      %59 = vector.broadcast %cst_34 : f32 to vector<1x1xf32>
      %60 = arith.subf %59, %58 : vector<1x1xf32>
      %cst_35 = arith.constant 1.000000e+00 : f32
      %61 = vector.broadcast %cst_35 : f32 to vector<1x1xf32>
      %62 = arith.mulf %60, %61 : vector<1x1xf32>
      %63 = vector.shape_cast %62 : vector<1x1xf32> to vector<1x1xf32>
      %64 = vector.broadcast %63 : vector<1x1xf32> to vector<1x128xf32>
      %c0_36 = arith.constant 0 : index
      %c0_37 = arith.constant 0 : index
      %c0_38 = arith.constant 0 : index
      %65 = vector.load %arg6[%c0_36, %c0_37, %c0_38] : memref<1x1x128xf32, #tpu.memory_space<vmem>>, vector<1x1x128xf32>
      %66 = vector.shape_cast %65 : vector<1x1x128xf32> to vector<1x128xf32>
      %67 = vector.shape_cast %64 : vector<1x128xf32> to vector<1x1x128xf32>
      tpu.vector_store %arg6[%c0_36, %c0_37, %c0_38], %67 {strides = array<i32>} : memref<1x1x128xf32, #tpu.memory_space<vmem>>, vector<1x1x128xf32>,
    } else {
    }
    return
  }
  func.func @transform_0(%arg0: i32, %arg1: i32, %arg2: memref<5xi32, #tpu.memory_space<smem>>) -> (i32, i32, i32) {
    %0 = arith.index_cast %arg0 : i32 to index
    %1 = memref.load %arg2[%0] : memref<5xi32, #tpu.memory_space<smem>>
    %c0_i32 = arith.constant 0 : i32
    %c0_i32_0 = arith.constant 0 : i32
    return %1, %arg1, %c0_i32 : i32, i32, i32
  }
  func.func @transform_1(%arg0: i32, %arg1: i32, %arg2: memref<5xi32, #tpu.memory_space<smem>>) -> (i32, i32, i32) {
    %0 = arith.index_cast %arg0 : i32 to index
    %1 = memref.load %arg2[%0] : memref<5xi32, #tpu.memory_space<smem>>
    %c0_i32 = arith.constant 0 : i32
    %c0_i32_0 = arith.constant 0 : i32
    return %1, %arg1, %c0_i32 : i32, i32, i32
  }
  func.func @transform_2(%arg0: i32, %arg1: i32, %arg2: memref<5xi32, #tpu.memory_space<smem>>) -> (i32, i32, i32) {
    %0 = arith.index_cast %arg0 : i32 to index
    %1 = memref.load %arg2[%0] : memref<5xi32, #tpu.memory_space<smem>>
    %c0_i32 = arith.constant 0 : i32
    %c0_i32_0 = arith.constant 0 : i32
    return %1, %arg1, %c0_i32 : i32, i32, i32
  }
  func.func @transform_3(%arg0: i32, %arg1: i32, %arg2: memref<5xi32, #tpu.memory_space<smem>>) -> (i32, i32, i32) {
    %c0_i32 = arith.constant 0 : i32
    %c0_i32_0 = arith.constant 0 : i32
    %c0_i32_1 = arith.constant 0 : i32
    return %arg0, %c0_i32, %c0_i32_0 : i32, i32, i32
  }
}

</mosaic_0001>

<llo_original>
// kernel: tpu_custom_call.1
$region0: #{tpu_custom_call.1}
  #allocation0 [shape = 'u32[]', space=smem, size = 0x4, offset = 0x4, fixed_abs, tag = 'smem constant byte address 0x4 - core index']
  #allocation1 [shape = 'u32[144,128]{1,0:T(1,128)}', space=vmem, size = 0x12000, scoped, tag = 'internal scratch']
  #allocation2 [shape = 'f32[3,1,256]{2,1,0:T(1,128)}', space=vmem, size = 0xc00, scoped, tag = 'scratch operand']
  #allocation3 [shape = 's32[1]{0}', space=sflag, size = 0x4, scoped, tag = 'scoped memory for tpu_custom_call.1']
  #allocation4 [shape = 'u8[512]{0}', space=smem, size = 0x200, scoped, tag = 'prefetched SMEM operand 0']
  %s0 = inlined_call_operand.hbm [shape: s32[5], index: 0, kind: input, shape index: {}]
  %s1 = inlined_call_operand.hbm [shape: f32[8,1,256], index: 1, kind: input, shape index: {}]
  %s2 = inlined_call_operand.hbm [shape: bf16[8,1,256], index: 2, kind: input, shape index: {}]
  %s3 = inlined_call_operand.hbm [shape: s8[8,1,256], index: 3, kind: input, shape index: {}]
  %s4 = inlined_call_operand.hbm [shape: f32[5,1,128], index: 4, kind: output, shape index: {}]
  %s5 = sld [smem:[#allocation0]]
  $region65: #{tpu_custom_call.1} parent=0
    _
  %s7 = ssub.s32 1, %s5
  %s8 = scalar_select 0, %s7, %s5
  %10 = dma.hbm_to_smem %s0, 16, [#allocation4], [#allocation3]
  %11 = dma.done [#allocation3], 16
  %12 = sfence
  $region1: #{tpu_custom_call.1} parent=0
    #allocation5 [shape = 'u8[2048]{0}', space=vmem, size = 0x800, scoped, tag = 'input window, operand 1']
    #allocation6 [shape = 's32[2]{0}', space=sflag, size = 0x8, scoped, tag = 'scoped memory for tpu_custom_call.1']
    #allocation7 [shape = 's32[2]{0}', space=sflag, size = 0x8, scoped, tag = 'scoped memory for tpu_custom_call.1']
    #allocation8 [shape = 'u8[2048]{0}', space=vmem, size = 0x800, scoped, tag = 'input window, operand 2']
    #allocation9 [shape = 's32[2]{0}', space=sflag, size = 0x8, scoped, tag = 'scoped memory for tpu_custom_call.1']
    #allocation10 [shape = 'u8[2048]{0}', space=vmem, size = 0x800, scoped, tag = 'input window, operand 3']
    #allocation11 [shape = 'u8[1024]{0}', space=vmem, size = 0x400, scoped, tag = 'output window, operand 0']
    %13 = vsyncpa [#allocation6], 0
    %s14 = scalar_lea.sflag [#allocation6], 1
    %15 = vsyncpa %s14, 0
    %16 = vsyncpa [#allocation9], 0
    %s17 = scalar_lea.sflag [#allocation9], 1
    %18 = vsyncpa %s17, 0
    %19 = vsyncpa [#allocation7], 0
    %s20 = scalar_lea.sflag [#allocation7], 1
    %21 = vsyncpa %s20, 0
    loop: start=0, step=1, limit=7
    $region2: #{tpu_custom_call.1} parent=1 // loop_pre_header
      _
    $region3: #{tpu_custom_call.1} parent=1 // loop_header
      %s23 = sphi 0, %s27
      %p24 = scmp.ge.s32.totalorder %s23, 7
      %s30 = sphi 0, %s42
      %s31 = sphi 0, %s38
      %s32 = sphi 0, %s30
      %s33 = sphi 0, %s31
      %s34 = sphi 0, %s32
      %s35 = sphi 0, %s33
      %s49 = sphi 0, %s51
      %s52 = sphi 0, %s49
      %s53 = sphi 0, %s52
      %s69 = sphi 0, %s53
      %s79 = sphi 0, %s81
      %s82 = sphi 0, %s79
      %s83 = sphi 0, %s82
      %s99 = sphi 0, %s83
      %s109 = sphi 0, %s111
      %s112 = sphi 0, %s109
      %s113 = sphi 0, %s112
      %s129 = sphi 0, %s113
      %s135 = sphi 0, %s137
      %s138 = sphi 0, %s135
      %s139 = sphi 0, %s138
      %s155 = sphi 0, %s139
    $region4: #{tpu_custom_call.1} parent=1 // loop_header_branch
      %26 = sbr.rel (%p24) target = $region8
    $region5: #{tpu_custom_call.1} parent=1 // loop_body
      %s28 = ssub.s32 %s23, 1
      %s29 = ssub.s32 %s23, 2
      %s36 = sadd.s32 1, %s31
      %p37 = scmp.ge.s32.totalorder %s36, 1
      %s38 = scalar_select %p37, 0, %s36
      %s39 = sadd.s32 1, %s30
      %s40 = scalar_select %p37, %s39, %s30
      %p41 = scmp.ge.s32.totalorder %s40, 5
      %s42 = scalar_select %p41, 0, %s40
      %s43 = sld [smem:[#allocation4 + %s30]]
      %s44 = sld [smem:[#allocation4 + %s42]]
      %s45 = ssub.s32 %s43, %s44
      %s46 = ssub.s32 %s31, %s38
      %s47 = sor.u32 %s45, %s46
      %p48 = scmp.eq.s32.totalorder %s47, 0
      %s50 = sadd.s32 %s49, 1
      %s51 = scalar_select %p48, %s49, %s50
      %p54 = pneg %p48
      %p55 = scmp.eq.s32.totalorder %s23, 4
      %p56 = por %p54, %p55
      %p57 = scmp.ne.s32.totalorder %s49, %s52
      %p58 = scmp.eq.s32.totalorder %s23, 0
      %p59 = por %p57, %p58
      %p60 = scmp.ne.s32.totalorder %s49, %s52
      %p61 = scmp.eq.s32.totalorder %s28, 4
      %p62 = por %p60, %p61
      %p63 = scmp.ne.s32.totalorder %s52, %s53
      %p64 = scmp.eq.s32.totalorder %s28, 0
      %p65 = por %p63, %p64
      %p66 = scmp.ne.s32.totalorder %s52, %s53
      %p67 = scmp.eq.s32.totalorder %s29, 4
      %p68 = por %p66, %p67
      %p70 = scmp.ne.s32.totalorder %s53, %s69
      %p71 = scmp.eq.s32.totalorder %s29, 0
      %p72 = por %p70, %p71
      %s73 = sld [smem:[#allocation4 + %s30]]
      %s74 = sld [smem:[#allocation4 + %s42]]
      %s75 = ssub.s32 %s73, %s74
      %s76 = ssub.s32 %s31, %s38
      %s77 = sor.u32 %s75, %s76
      %p78 = scmp.eq.s32.totalorder %s77, 0
      %s80 = sadd.s32 %s79, 1
      %s81 = scalar_select %p78, %s79, %s80
      %p84 = pneg %p78
      %p85 = scmp.eq.s32.totalorder %s23, 4
      %p86 = por %p84, %p85
      %p87 = scmp.ne.s32.totalorder %s79, %s82
      %p88 = scmp.eq.s32.totalorder %s23, 0
      %p89 = por %p87, %p88
      %p90 = scmp.ne.s32.totalorder %s79, %s82
      %p91 = scmp.eq.s32.totalorder %s28, 4
      %p92 = por %p90, %p91
      %p93 = scmp.ne.s32.totalorder %s82, %s83
      %p94 = scmp.eq.s32.totalorder %s28, 0
      %p95 = por %p93, %p94
      %p96 = scmp.ne.s32.totalorder %s82, %s83
      %p97 = scmp.eq.s32.totalorder %s29, 4
      %p98 = por %p96, %p97
      %p100 = scmp.ne.s32.totalorder %s83, %s99
      %p101 = scmp.eq.s32.totalorder %s29, 0
      %p102 = por %p100, %p101
      %s103 = sld [smem:[#allocation4 + %s30]]
      %s104 = sld [smem:[#allocation4 + %s42]]
      %s105 = ssub.s32 %s103, %s104
      %s106 = ssub.s32 %s31, %s38
      %s107 = sor.u32 %s105, %s106
      %p108 = scmp.eq.s32.totalorder %s107, 0
      %s110 = sadd.s32 %s109, 1
      %s111 = scalar_select %p108, %s109, %s110
      %p114 = pneg %p108
      %p115 = scmp.eq.s32.totalorder %s23, 4
      %p116 = por %p114, %p115
      %p117 = scmp.ne.s32.totalorder %s109, %s112
      %p118 = scmp.eq.s32.totalorder %s23, 0
      %p119 = por %p117, %p118
      %p120 = scmp.ne.s32.totalorder %s109, %s112
      %p121 = scmp.eq.s32.totalorder %s28, 4
      %p122 = por %p120, %p121
      %p123 = scmp.ne.s32.totalorder %s112, %s113
      %p124 = scmp.eq.s32.totalorder %s28, 0
      %p125 = por %p123, %p124
      %p126 = scmp.ne.s32.totalorder %s112, %s113
      %p127 = scmp.eq.s32.totalorder %s29, 4
      %p128 = por %p126, %p127
      %p130 = scmp.ne.s32.totalorder %s113, %s129
      %p131 = scmp.eq.s32.totalorder %s29, 0
      %p132 = por %p130, %p131
      %s133 = ssub.s32 %s30, %s42
      %p134 = scmp.eq.s32.totalorder %s133, 0
      %s136 = sadd.s32 %s135, 1
      %s137 = scalar_select %p134, %s135, %s136
      %p140 = pneg %p134
      %p141 = scmp.eq.s32.totalorder %s23, 4
      %p142 = por %p140, %p141
      %p143 = scmp.ne.s32.totalorder %s135, %s138
      %p144 = scmp.eq.s32.totalorder %s23, 0
      %p145 = por %p143, %p144
      %p146 = scmp.ne.s32.totalorder %s135, %s138
      %p147 = scmp.eq.s32.totalorder %s28, 4
      %p148 = por %p146, %p147
      %p149 = scmp.ne.s32.totalorder %s138, %s139
      %p150 = scmp.eq.s32.totalorder %s28, 0
      %p151 = por %p149, %p150
      %p152 = scmp.ne.s32.totalorder %s138, %s139
      %p153 = scmp.eq.s32.totalorder %s29, 4
      %p154 = por %p152, %p153
      %p156 = scmp.ne.s32.totalorder %s139, %s155
      %p157 = scmp.eq.s32.totalorder %s29, 0
      %p158 = por %p156, %p157
      %p159 = scmp.le.s32.totalorder 1, %s23
      %p160 = scmp.lt.s32.totalorder %s23, 6
      %p161 = pnand %p159, %p160
      %p162 = pneg %p161
      // Predicated region
      $region9: #{tpu_custom_call.1} parent=5 // pred_check
        _
      $region10: #{tpu_custom_call.1} parent=5 // pred_check_branch
        %164 = sbr.rel (%p161) target = $region12
      $region11: #{tpu_custom_call.1} parent=5 // pred_region
        %s165 = ssub.s32 %s23, 1
      $region12: #{tpu_custom_call.1} parent=5 // pred_fallthru
        _
      %p166 = scmp.lt.s32.totalorder %s23, 5
      // Predicated region
      $region13: #{tpu_custom_call.1} parent=5 // pred_check
        %p167 = pneg %p166
      $region14: #{tpu_custom_call.1} parent=5 // pred_check_branch
        %169 = sbr.rel (%p167) target = $region16
      $region15: #{tpu_custom_call.1} parent=5 // pred_region
        // Predicated region
        $region17: #{tpu_custom_call.1} parent=15 // pred_check
          %p170 = pneg %p59
        $region18: #{tpu_custom_call.1} parent=15 // pred_check_branch
          %172 = sbr.rel (%p170) target = $region20
        $region19: #{tpu_custom_call.1} parent=15 // pred_region
          %s173 = sand.u32 %s49, 1
          %s174 = scalar_lea.sflag [#allocation6], %s173
          %s175 = sand.u32 %s49, 1
          %s176 = smul.addr %s175, 2
          %s177 = scalar_lea.vmem [#allocation5], %s176
          %s178 = sld [smem:[#allocation4 + %s30]]
          %s180 = ssub.s32 32, 32
          %181 = vsyncadd %s174, %s180
          %s182 = smul.addr %s31, 2
          %s183 = smul.addr %s178, 2
          %s184 = sadd.s32 %s182, %s183
          %s185 = smul.addr %s184, 16
          %s186 = scalar_lea.hbm %s1, %s185
          %s188 = sshll.u32 %s177, 4
          %s189 = int_to_ptr.vmem [resolvable:$true] %s188
          %191 = dma.hbm_to_vmem [thread:$0]  %s186, 32, %s189, %s174
        $region20: #{tpu_custom_call.1} parent=15 // pred_fallthru
          _
        // Predicated region
        $region21: #{tpu_custom_call.1} parent=15 // pred_check
          %p192 = pneg %p89
        $region22: #{tpu_custom_call.1} parent=15 // pred_check_branch
          %194 = sbr.rel (%p192) target = $region24
        $region23: #{tpu_custom_call.1} parent=15 // pred_region
          %s195 = sand.u32 %s23, 1
          %s196 = scalar_lea.sflag [#allocation9], %s195
          %s197 = sand.u32 %s79, 1
          %s198 = smul.addr %s197, 2
          %s199 = scalar_lea.vmem [#allocation8], %s198
          %s200 = sld [smem:[#allocation4 + %s30]]
          %s202 = ssub.s32 32, 32
          %203 = vsyncadd %s196, %s202
          %s204 = smul.addr %s31, 2
          %s205 = smul.addr %s200, 2
          %s206 = sadd.s32 %s204, %s205
          %s207 = smul.addr %s206, 16
          %s208 = scalar_lea.hbm %s2, %s207
          %s210 = sshll.u32 %s199, 4
          %s211 = int_to_ptr.vmem [resolvable:$true] %s210
          %213 = dma.hbm_to_vmem [thread:$0]  %s208, 32, %s211, %s196
        $region24: #{tpu_custom_call.1} parent=15 // pred_fallthru
          _
        // Predicated region
        $region25: #{tpu_custom_call.1} parent=15 // pred_check
          %p214 = pneg %p119
        $region26: #{tpu_custom_call.1} parent=15 // pred_check_branch
          %216 = sbr.rel (%p214) target = $region28
        $region27: #{tpu_custom_call.1} parent=15 // pred_region
          %s217 = sand.u32 %s23, 1
          %s218 = scalar_lea.sflag [#allocation9], %s217
          %s219 = sand.u32 %s109, 1
          %s220 = smul.addr %s219, 2
          %s221 = scalar_lea.vmem [#allocation10], %s220
          %s222 = sld [smem:[#allocation4 + %s30]]
          %s224 = ssub.s32 32, 32
          %225 = vsyncadd %s218, %s224
          %s226 = smul.addr %s31, 2
          %s227 = smul.addr %s222, 2
          %s228 = sadd.s32 %s226, %s227
          %s229 = smul.addr %s228, 16
          %s230 = scalar_lea.hbm %s3, %s229
          %s232 = sshll.u32 %s221, 4
          %s233 = int_to_ptr.vmem [resolvable:$true] %s232
          %235 = dma.hbm_to_vmem [thread:$0]  %s230, 32, %s233, %s218
        $region28: #{tpu_custom_call.1} parent=15 // pred_fallthru
          _
      $region16: #{tpu_custom_call.1} parent=5 // pred_fallthru
        _
      %p236 = scmp.le.s32.totalorder 1, %s23
      %p237 = scmp.lt.s32.totalorder %s23, 6
      %p238 = pnand %p236, %p237
      %p239 = pneg %p238
      // Predicated region
      $region29: #{tpu_custom_call.1} parent=5 // pred_check
        _
      $region30: #{tpu_custom_call.1} parent=5 // pred_check_branch
        %241 = sbr.rel (%p238) target = $region32
      $region31: #{tpu_custom_call.1} parent=5 // pred_region
        %s242 = ssub.s32 %s23, 1
        %s243 = sand.u32 %s52, 1
        %s244 = scalar_lea.sflag [#allocation6], %s243
        %s245 = sand.u32 %s52, 1
        %s246 = smul.addr %s245, 2
        %s247 = scalar_lea.vmem [#allocation5], %s246
        // Predicated region
        $region33: #{tpu_custom_call.1} parent=31 // pred_check
          %p248 = pneg %p65
        $region34: #{tpu_custom_call.1} parent=31 // pred_check_branch
          %250 = sbr.rel (%p248) target = $region36
        $region35: #{tpu_custom_call.1} parent=31 // pred_region
          %251 = dma.done %s244, 32
        $region36: #{tpu_custom_call.1} parent=31 // pred_fallthru
          _
        %s252 = sand.u32 %s28, 1
        %s253 = scalar_lea.sflag [#allocation9], %s252
        %s254 = sand.u32 %s82, 1
        %s255 = smul.addr %s254, 2
        %s256 = scalar_lea.vmem [#allocation8], %s255
        // Predicated region
        $region37: #{tpu_custom_call.1} parent=31 // pred_check
          %p257 = pneg %p95
        $region38: #{tpu_custom_call.1} parent=31 // pred_check_branch
          %259 = sbr.rel (%p257) target = $region40
        $region39: #{tpu_custom_call.1} parent=31 // pred_region
          %260 = dma.done %s253, 32
        $region40: #{tpu_custom_call.1} parent=31 // pred_fallthru
          _
        %s261 = sand.u32 %s28, 1
        %s262 = scalar_lea.sflag [#allocation9], %s261
        %s263 = sand.u32 %s112, 1
        %s264 = smul.addr %s263, 2
        %s265 = scalar_lea.vmem [#allocation10], %s264
        // Predicated region
        $region41: #{tpu_custom_call.1} parent=31 // pred_check
          %p266 = pneg %p125
        $region42: #{tpu_custom_call.1} parent=31 // pred_check_branch
          %268 = sbr.rel (%p266) target = $region44
        $region43: #{tpu_custom_call.1} parent=31 // pred_region
          %269 = dma.done %s262, 32
        $region44: #{tpu_custom_call.1} parent=31 // pred_fallthru
          _
        %s270 = sand.u32 %s52, 1
        %s271 = scalar_lea.sflag [#allocation6], %s270
        %s272 = sand.u32 %s52, 1
        %s273 = smul.addr %s272, 2
        %s274 = scalar_lea.vmem [#allocation5], %s273
        %p275 = pneg %p65
        %p276 = pneg %p62
        %s277 = sand.u32 %s28, 1
        %s278 = scalar_lea.sflag [#allocation9], %s277
        %s279 = sand.u32 %s82, 1
        %s280 = smul.addr %s279, 2
        %s281 = scalar_lea.vmem [#allocation8], %s280
        %p282 = pneg %p95
        %p283 = pneg %p92
        %s284 = sand.u32 %s28, 1
        %s285 = scalar_lea.sflag [#allocation9], %s284
        %s286 = sand.u32 %s112, 1
        %s287 = smul.addr %s286, 2
        %s288 = scalar_lea.vmem [#allocation10], %s287
        %p289 = pneg %p125
        %p290 = pneg %p122
        %p291 = pneg %p151
        %p292 = pneg %p148
        %s293 = sand.u32 %s138, 1
        %s294 = scalar_lea.sflag [#allocation7], %s293
        %s295 = sand.u32 %s138, 1
        %s296 = scalar_lea.vmem [#allocation11], %s295
        %s297 = sld [smem:[#allocation4 + %s32]]
        %s298 = sld [smem:[#allocation4 + %s32]]
        %s299 = sld [smem:[#allocation4 + %s32]]
        %p300 = scmp.eq.s32.totalorder %s33, 0
        // Predicated region
        $region45: #{tpu_custom_call.1} parent=31 // pred_check
          %p301 = pneg %p300
        $region46: #{tpu_custom_call.1} parent=31 // pred_check_branch
          %303 = sbr.rel (%p301) target = $region48
        $region47: #{tpu_custom_call.1} parent=31 // pred_region
          %v304 = vlaneseq
          %vm305 = vcmp.ge.s32.totalorder %v304, 0
          %vm306 = vcmp.lt.s32.totalorder %v304, 256
          %vm307 = vmand %vm305, %vm306
          %308 = vst.msk [vmem:[#allocation2] sm:$0x3] %vm307, 0.0
          %309 = vst.msk [vmem:[#allocation2 + $0x2] sm:$0x3] %vm307, 0.0
          %310 = vst.msk [vmem:[#allocation2 + $0x4] sm:$0x3] %vm307, 0.0
        $region48: #{tpu_custom_call.1} parent=31 // pred_fallthru
          _
        %v311 = vld [vmem:[%s247] sm:$0x3]
        %v312 = vxor.u32 %v311, 2147483648
        %v313 = vmul.f32 %v312, 1.442695
        %v314 = vpow.pop %v313
        %v315 = vadd.f32 %v314, 1.0
        %v316 = vrcp.pop %v315
        %v317 = vmul.f32 1.0, %v316
        %v318 = vld [vmem:[%s256] sm:$0x3]
        %v319 = vunpack.c.l.bf16 %v318
        %v320 = vld [vmem:[%s265] sm:$0x3]
        %v321 = vunpack.c.0.s8 %v320
        %v322 = vcvt.s32.f32 %v321
        %v325 = vunpack.c.l.s4 1966171168
        %v326 = vunpack.c.0.s8 %v325
        %v327 = vlaneseq
        %v328 = vshrl.u32 %v327, 7
        %v329 = vsub.s32 %v326, %v328
        %v330 = vrot.slane %v322, %v329
        %v332 = vunpack.c.l.s4 1966171168
        %v333 = vunpack.c.0.s8 %v332
        %v334 = vlaneseq
        %v335 = vshrl.u32 %v334, 7
        %v336 = vsub.s32 %v333, %v335
        %v337 = vrot.slane %v330, %v336
        %v339 = vmul.f32 %v317, %v337
        %v341 = vunpack.c.l.s4 1983009808
        %v342 = vunpack.c.0.s8 %v341
        %v343 = vlaneseq
        %v344 = vshrl.u32 %v343, 7
        %v345 = vsub.s32 %v342, %v344
        %v346 = vrot.slane %v322, %v345
        %v348 = vmul.f32 %v319, %v346
        %v349 = vld [vmem:[#allocation2] sm:$0x3]
        %v352 = vunpack.c.l.s4 1966171168
        %v353 = vunpack.c.0.s8 %v352
        %v354 = vlaneseq
        %v355 = vshrl.u32 %v354, 7
        %v356 = vsub.s32 %v353, %v355
        %v357 = vrot.slane %v348, %v356
        %v359 = vmul.f32 %v339, %v357
        %v360 = vadd.f32 %v349, %v359
        %v361 = vlaneseq
        %vm362 = vcmp.ge.s32.totalorder %v361, 0
        %vm363 = vcmp.lt.s32.totalorder %v361, 256
        %vm364 = vmand %vm362, %vm363
        %365 = vst.msk [vmem:[#allocation2] sm:$0x3] %vm364, %v360
        %s366 = scalar_lea.vmem [#allocation2], 2
        %v367 = vld [vmem:[%s366] sm:$0x3]
        %v368 = vmul.f32 %v339, %v339
        %v369 = vadd.f32 %v367, %v368
        %370 = vst.msk [vmem:[%s366] sm:$0x3] %vm364, %v369
        %s371 = scalar_lea.vmem [#allocation2], 4
        %v372 = vld [vmem:[%s371] sm:$0x3]
        %v373 = vmul.f32 %v348, %v348
        %v376 = vunpack.c.l.s4 1966171168
        %v377 = vunpack.c.0.s8 %v376
        %v378 = vlaneseq
        %v379 = vshrl.u32 %v378, 7
        %v380 = vsub.s32 %v377, %v379
        %v381 = vrot.slane %v373, %v380
        %v383 = vadd.f32 %v372, %v381
        %384 = vst.msk [vmem:[%s371] sm:$0x3] %vm364, %v383
        // Predicated region
        $region49: #{tpu_custom_call.1} parent=31 // pred_check
          %p385 = pneg %p300
        $region50: #{tpu_custom_call.1} parent=31 // pred_check_branch
          %387 = sbr.rel (%p385) target = $region52
        $region51: #{tpu_custom_call.1} parent=31 // pred_region
          %v388 = vld [vmem:[#allocation2] sm:$0x3]
          %v389 = vld [vmem:[#allocation2 + $0x2] sm:$0x3]
          %v390 = vld [vmem:[#allocation2 + $0x4] sm:$0x3]
          %v394 = vlaneseq
          %v395 = vshrl.u32 %v394, 7
          %v396 = vsub.s32 0, %v395
          %v397 = vrot.slane %v388, %v396
          %v398 = vlaneseq
          %v399 = vshrl.u32 %v398, 7
          %v400 = vsub.s32 1, %v399
          %v401 = vrot.slane %v388, %v400
          %v402 = vlaneseq
          %v403 = vshrl.u32 %v402, 7
          %v404 = vsub.s32 0, %v403
          %v405 = vrot.slane %v389, %v404
          %v406 = vlaneseq
          %v407 = vshrl.u32 %v406, 7
          %v408 = vsub.s32 1, %v407
          %v409 = vrot.slane %v389, %v408
          %v410 = vlaneseq
          %v411 = vshrl.u32 %v410, 7
          %v412 = vsub.s32 0, %v411
          %v413 = vrot.slane %v390, %v412
          %v414 = vlaneseq
          %v415 = vshrl.u32 %v414, 7
          %v416 = vsub.s32 1, %v415
          %v417 = vrot.slane %v390, %v416
          %vm424 = vcmask 1040384
          %v425 = vsel %vm424, %v397, 0.0
          %v426 = vsel %vm424, %v401, 0.0
          %v427 = vadd.f32 %v425, %v426
          %428 = vadd.xlane.f32.xlu0 %v427
          %v429 = vpop.xlane.xlu0 %428
          %v430 = vsel %vm424, %v405, 0.0
          %v431 = vsel %vm424, %v409, 0.0
          %v432 = vadd.f32 %v430, %v431
          %433 = vadd.xlane.f32.xlu0 %v432
          %v434 = vpop.xlane.xlu0 %433
          %v435 = vsel %vm424, %v413, 0.0
          %v436 = vsel %vm424, %v417, 0.0
          %v437 = vadd.f32 %v435, %v436
          %438 = vadd.xlane.f32.xlu0 %v437
          %v439 = vpop.xlane.xlu0 %438
          %v440 = vadd.f32 %v429, 0.0
          %v441 = vadd.f32 %v434, 0.0
          %v442 = vadd.f32 %v439, 0.0
          %v443 = vmul.f32 %v440, 2.0
          %v444 = vadd.f32 %v441, %v442
          %v445 = vmax.f32 %v444, 1e-08
          %v446 = vrcp.pop %v445
          %v447 = vmul.f32 %v443, %v446
          %v448 = vsub.f32 1.0, %v447
          %449 = vst [vmem:[%s296] sm:$0x1] %v448
        $region52: #{tpu_custom_call.1} parent=31 // pred_fallthru
          _
        %s450 = sand.u32 %s138, 1
        %s451 = scalar_lea.sflag [#allocation7], %s450
        %s452 = sand.u32 %s138, 1
        %s453 = scalar_lea.vmem [#allocation11], %s452
        // Predicated region
        $region53: #{tpu_custom_call.1} parent=31 // pred_check
          %p454 = pneg %p148
        $region54: #{tpu_custom_call.1} parent=31 // pred_check_branch
          %456 = sbr.rel (%p454) target = $region56
        $region55: #{tpu_custom_call.1} parent=31 // pred_region
          %s458 = ssub.s32 16, 16
          %459 = vsyncadd %s451, %s458
          %s460 = smul.addr %s32, 16
          %s461 = scalar_lea.hbm %s4, %s460
          %s463 = sshll.u32 %s453, 4
          %s464 = int_to_ptr.vmem [resolvable:$true] %s463
          %466 = dma.vmem_to_hbm [thread:$0]  %s464, 16, %s461, %s451
        $region56: #{tpu_custom_call.1} parent=31 // pred_fallthru
          _
      $region32: #{tpu_custom_call.1} parent=5 // pred_fallthru
        _
      %p467 = scmp.le.s32.totalorder 2, %s23
      // Predicated region
      $region57: #{tpu_custom_call.1} parent=5 // pred_check
        %p468 = pneg %p467
      $region58: #{tpu_custom_call.1} parent=5 // pred_check_branch
        %470 = sbr.rel (%p468) target = $region60
      $region59: #{tpu_custom_call.1} parent=5 // pred_region
        %s471 = ssub.s32 %s23, 2
        // Predicated region
        $region61: #{tpu_custom_call.1} parent=59 // pred_check
          %p472 = pneg %p154
        $region62: #{tpu_custom_call.1} parent=59 // pred_check_branch
          %474 = sbr.rel (%p472) target = $region64
        $region63: #{tpu_custom_call.1} parent=59 // pred_region
          %s475 = sand.u32 %s139, 1
          %s476 = scalar_lea.sflag [#allocation7], %s475
          %s477 = sand.u32 %s139, 1
          %s478 = scalar_lea.vmem [#allocation11], %s477
          %479 = dma.done %s476, 16
        $region64: #{tpu_custom_call.1} parent=59 // pred_fallthru
          _
      $region60: #{tpu_custom_call.1} parent=5 // pred_fallthru
        _
    $region6: #{tpu_custom_call.1} parent=1 // loop_footer
      %s27 = sadd.s32 1, %s23
    $region7: #{tpu_custom_call.1} parent=1 // loop_footer_branch
      %22 = sbr.rel target = $region3
    $region8: #{tpu_custom_call.1} parent=1 // loop_exit
      _
    %480 = vsyncpa [#allocation6], 1
    %s481 = scalar_lea.sflag [#allocation6], 1
    %482 = vsyncpa %s481, 1
    %483 = vsyncpa [#allocation9], 1
    %s484 = scalar_lea.sflag [#allocation9], 1
    %485 = vsyncpa %s484, 1
    %486 = vsyncpa [#allocation7], 1
    %s487 = scalar_lea.sflag [#allocation7], 1
    %488 = vsyncpa %s487, 1

</llo_original>
